<compile_context>
chip_gen: v7x
topology: tpu7x:2x2x1
jax: 0.10.0
libtpu: 0.0.40
codegen_flags: <defaults>
</compile_context>

<pallas_src>
import jax
import jax.numpy as jnp
from jax import lax
from jax.experimental import pallas as pl
from jax.experimental.pallas import tpu as pltpu


def _round_up(a, m):
    return ((a + m - 1) // m) * m


def _vmem_capacity_bytes():
    try:
        return int(pltpu.get_tpu_info().vmem_capacity_bytes)
    except Exception:
        return 64 * 1024 * 1024  # conservative (v7x per-TC physical VMEM)


# ---------------------------------------------------------------------------
# In-kernel building blocks
# ---------------------------------------------------------------------------
# Flat weight layout in SMEM (47 f32 scalars):
#   [0:28]  w1 (4,7) row-major    [28:32] b1 (4,)
#   [32:44] w2 (3,4) row-major    [44:47] b2 (3,)
_W1_OFF, _B1_OFF, _W2_OFF, _B2_OFF, _W_LEN = 0, 28, 32, 44, 47


def _logit_planes(x_ref, w_ref):
    """x_ref: (7, S, 128) VMEM; w_ref: (47,) f32 SMEM -> list of 3 (S, 128) planes.

    The contractions are K=7 / K=4 -- far too small for an MXU pass, so they are
    40 scalar-broadcast VPU multiply-adds on fully dense (sublane x lane) vregs,
    with the weights/biases read straight from SMEM.
    """
    xs = [x_ref[f] for f in range(7)]
    hs = []
    for c in range(4):
        acc = xs[0] * w_ref[_W1_OFF + 7 * c + 0]
        for f in range(1, 7):
            acc = acc + xs[f] * w_ref[_W1_OFF + 7 * c + f]
        hs.append(jnp.maximum(acc + w_ref[_B1_OFF + c], 0.0))        # ReLU
    outs = []
    for k in range(3):
        acc = hs[0] * w_ref[_W2_OFF + 4 * k + 0]
        for c in range(1, 4):
            acc = acc + hs[c] * w_ref[_W2_OFF + 4 * k + c]
        outs.append(acc + w_ref[_B2_OFF + k])
    return outs


def _valid_mask(rows, limit):
    """(rows, 128) bool plane: packed column index (row*128 + lane) < limit."""
    sub = lax.broadcasted_iota(jnp.int32, (rows, 128), 0)
    lane = lax.broadcasted_iota(jnp.int32, (rows, 128), 1)
    return (sub * 128 + lane) < limit


def _softmax_plane(plane, valid):
    """Numerically stable softmax over an entire (rows, 128) plane (= batch axis)."""
    if valid is not None:
        plane = jnp.where(valid, plane, -jnp.inf)   # padded columns -> exp == 0
    m = jnp.max(jnp.max(plane, axis=1, keepdims=True), axis=0, keepdims=True)
    e = jnp.exp(plane - m)
    l = jnp.sum(jnp.sum(e, axis=1, keepdims=True), axis=0, keepdims=True)
    return e * (1.0 / l)                            # exact reciprocal (review note)


# ---------------------------------------------------------------------------
# Path 1: single pallas_call, output VMEM-resident across a sequential grid
# ---------------------------------------------------------------------------
def _make_resident_kernel(batch, nb, tbs, nt, need_mask):
    def kernel(w_ref, x_ref, o_ref):
        logits = _logit_planes(x_ref, w_ref)
        if nt == 1:
            valid = _valid_mask(nb, batch) if need_mask else None
            for k in range(3):
                o_ref[k] = _softmax_plane(logits[k], valid)
        else:
            t = pl.program_id(0)
            start = pl.multiple_of(t * tbs, tbs)     # sublane-aligned (tbs % 8 == 0)
            for k in range(3):
                o_ref[k, pl.ds(start, tbs), :] = logits[k]

            @pl.when(t == nt - 1)
            def _():
                # Whole batch now sits in the resident output; mask padded
                # columns once and softmax each channel plane in VMEM.
                valid = _valid_mask(nb, batch) if need_mask else None
                for k in range(3):
                    o_ref[k] = _softmax_plane(o_ref[k], valid)
    return kernel


# ---------------------------------------------------------------------------
# Path 2 (huge batches): two passes through HBM, no re-read of x
# ---------------------------------------------------------------------------
def _make_logits_stats_kernel(batch, tbs, need_mask):
    tb = tbs * 128

    def kernel(w_ref, x_ref, e_ref, stats_ref):
        t = pl.program_id(0)
        logits = _logit_planes(x_ref, w_ref)
        # Only the globally-last columns can be padding; for every other tile the
        # limit is >= TB so the compare is all-true (cheap).  No tile can be
        # fully padded, so the per-tile max is always finite.
        valid = _valid_mask(tbs, batch - t * tb) if need_mask else None
        m_rows, s_rows = [], []
        for k in range(3):
            lk = logits[k]
            if valid is not None:
                lk = jnp.where(valid, lk, -jnp.inf)
            m = jnp.max(jnp.max(lk, axis=1, keepdims=True), axis=0, keepdims=True)
            e = jnp.exp(lk - m)                      # padded columns -> exactly 0
            s = jnp.sum(jnp.sum(e, axis=1, keepdims=True), axis=0, keepdims=True)
            e_ref[k] = e
            m_rows.append(jnp.broadcast_to(m, (1, 128)))
            s_rows.append(jnp.broadcast_to(s, (1, 128)))
        zero = jnp.zeros((1, 128), jnp.float32)
        stats_ref[0] = jnp.concatenate(m_rows + [zero] + s_rows + [zero], axis=0)
    return kernel


def _rescale_kernel(scale_ref, e_ref, o_ref):
    # In-place (io-aliased) rescale: o = e * exp(m_tile - m_global) / l_global,
    # with the per-tile scalar factors coming in through SMEM.
    t = pl.program_id(0)
    for k in range(3):
        o_ref[k] = e_ref[k] * scale_ref[4 * t + k]


# ---------------------------------------------------------------------------
# Host-side wrapper
# ---------------------------------------------------------------------------
def neural_network_forward(x, w1, b1, w2, b2, *, block_b=None, two_pass=None):
    """x: (B, 7); w1: (4, 7); b1: (4,); w2: (3, 4); b2: (3,). Returns (B, 3)."""
    B = int(x.shape[0])
    assert x.shape[-1] == 7 and B >= 1

    # ---- tile geometry: batch packed over sublanes AND lanes (NB x 128) -------
    if block_b is None:                       # review item 1: big tiles, scale w/ B
        block_b = min(131072, max(32768, _round_up(B // 16 + 1, 1024)))
    NB_min = _round_up(B, 128) // 128
    TBs_req = max(8, _round_up(int(block_b), 1024) // 128)   # sublane groups/tile
    if NB_min <= TBs_req:
        TBs = NB = NB_min                     # single tile == full array (any NB ok)
        NT = 1
    else:
        TBs = TBs_req                         # multiple of 8 -> (8,128)-legal blocks
        NB = _round_up(NB_min, TBs)
        NT = NB // TBs
    Bp, TB = NB * 128, TBs * 128
    need_mask = (Bp != B)

    # ---- path selection: VMEM-resident single pass vs two passes through HBM --
    cap = _vmem_capacity_bytes()
    budget = int(cap * 0.8)
    resident_bytes = 40 * Bp + 64 * TB + (4 << 20)   # output + temps + x bufs + slack
    if two_pass is None:
        two_pass = resident_bytes > budget

    # ---- layout plumbing (wrapper-side) ----------------------------------------
    # TODO(synk): fold the (B,7)->(7,NB,128) repack (transpose) into the kernel via
    # an in-VMEM transpose of natural-layout blocks; kept in the wrapper so the
    # module keeps its (B,7)->(B,3) contract.
    xt = jnp.asarray(x, jnp.float32).T                       # (7, B)
    if Bp != B:
        xt = jnp.pad(xt, ((0, 0), (0, Bp - B)))              # zero-pad lanes
    xp = xt.reshape(7, NB, 128)
    wflat = jnp.concatenate([
        jnp.asarray(w1, jnp.float32).reshape(-1),
        jnp.asarray(b1, jnp.float32).reshape(-1),
        jnp.asarray(w2, jnp.float32).reshape(-1),
        jnp.asarray(b2, jnp.float32).reshape(-1)])           # (47,) -> SMEM

    smem_spec = pl.BlockSpec(memory_space=pltpu.MemorySpace.SMEM)
    x_spec = pl.BlockSpec((7, TBs, 128), lambda t: (0, t, 0))
    y_tile_spec = pl.BlockSpec((3, TBs, 128), lambda t: (0, t, 0))

    flops = 80 * Bp          # 40 multiply-adds per batch column
    transc = 3 * Bp          # one exp per logit

    if not two_pass:
        # Single pallas_call: (3, NB, 128) output stays VMEM-resident across the
        # sequential grid; batch softmax runs in VMEM on the last step.
        yp = pl.pallas_call(
            _make_resident_kernel(B, NB, TBs, NT, need_mask),
            grid=(NT,),
            in_specs=[smem_spec, x_spec],
            out_specs=pl.BlockSpec((3, NB, 128), lambda t: (0, 0, 0)),
            out_shape=jax.ShapeDtypeStruct((3, NB, 128), jnp.float32),
            compiler_params=pltpu.CompilerParams(
                dimension_semantics=("arbitrary",),
                vmem_limit_bytes=budget),
            cost_estimate=pl.CostEstimate(
                flops=flops, transcendentals=transc, bytes_accessed=40 * Bp),
        )(wflat, xp)
    else:
        # Pass 1 (parallel over tiles -> megacore-shardable on v7x): per-tile
        # e = exp(logits - m_tile) plus per-tile (m, sum e) stats.
        e_pad, stats = pl.pallas_call(
            _make_logits_stats_kernel(B, TBs, need_mask),
            grid=(NT,),
            in_specs=[smem_spec, x_spec],
            out_specs=[y_tile_spec,
                       pl.BlockSpec((1, 8, 128), lambda t: (t, 0, 0))],
            out_shape=[jax.ShapeDtypeStruct((3, NB, 128), jnp.float32),
                       jax.ShapeDtypeStruct((NT, 8, 128), jnp.float32)],
            compiler_params=pltpu.CompilerParams(
                dimension_semantics=("parallel",),
                vmem_limit_bytes=budget),
            cost_estimate=pl.CostEstimate(
                flops=flops, transcendentals=transc, bytes_accessed=40 * Bp),
        )(wflat, xp)

        # Tiny (NT, 3) log-sum-exp merge in plain JAX; the per-tile rescale
        # factors go back into the kernel through SMEM.
        m_t = stats[:, 0:3, 0]                               # (NT, 3)
        s_t = stats[:, 4:7, 0]                               # (NT, 3)
        m_g = jnp.max(m_t, axis=0, keepdims=True)            # (1, 3)
        l_g = jnp.sum(s_t * jnp.exp(m_t - m_g), axis=0, keepdims=True)
        scale = jnp.exp(m_t - m_g) / l_g                     # (NT, 3)
        scale4 = jnp.concatenate(
            [scale, jnp.zeros((NT, 1), jnp.float32)], axis=1).reshape(-1)

        # Pass 2 (parallel): in-place rescale of e (never re-reads x, never
        # re-runs the matmuls).
        yp = pl.pallas_call(
            _rescale_kernel,
            grid=(NT,),
            in_specs=[smem_spec, y_tile_spec],
            out_specs=y_tile_spec,
            out_shape=jax.ShapeDtypeStruct((3, NB, 128), jnp.float32),
            input_output_aliases={1: 0},
            compiler_params=pltpu.CompilerParams(
                dimension_semantics=("parallel",),
                vmem_limit_bytes=budget),
            cost_estimate=pl.CostEstimate(
                flops=3 * Bp, transcendentals=0, bytes_accessed=24 * Bp),
        )(scale4, e_pad)

    # Back to the PyTorch (B, 3) layout; padded columns (exact zeros) dropped.
    return yp.reshape(3, Bp)[:, :B].T


# ---------------------------------------------------------------------------
# Test harness
# ---------------------------------------------------------------------------
def _torch_like_linear_init(key, out_features, in_features):
    """Deterministic init matching nn.Linear default: U(-1/sqrt(in), 1/sqrt(in))."""
    kw, kb = jax.random.split(key)
    bound = 1.0 / (in_features ** 0.5)
    w = jax.random.uniform(kw, (out_features, in_features),
                           minval=-bound, maxval=bound, dtype=jnp.float32)
    b = jax.random.uniform(kb, (out_features,),
                           minval=-bound, maxval=bound, dtype=jnp.float32)
    return w, b


def _reference(x, w1, b1, w2, b2):
    hp = lax.Precision.HIGHEST
    h = jnp.maximum(jnp.dot(x, w1.T, precision=hp) + b1, 0.0)
    logits = jnp.dot(h, w2.T, precision=hp) + b2
    return jax.nn.softmax(logits, axis=0)            # Softmax over the batch dim


if __name__ == "__main__":
    key = jax.random.PRNGKey(0)
    k_x, k_l1, k_l2 = jax.random.split(key, 3)
    w1, b1 = _torch_like_linear_init(k_l1, 4, 7)     # nn.Linear(7, 4)
    w2, b2 = _torch_like_linear_init(k_l2, 3, 4)     # nn.Linear(4, 3)

    cases = [
        (200, {}),                                   # NT=1 resident, padded/masked
        (256, {}),                                   # NT=1 resident, no padding
        (3000, dict(block_b=1024)),                  # NT=3 resident streaming path
        (3000, dict(block_b=1024, two_pass=True)),   # NT=3 two-pass + io-alias path
    ]
    for B, kwargs in cases:
        x = jax.random.normal(jax.random.fold_in(k_x, B), (B, 7), dtype=jnp.float32)
        out = jax.block_until_ready(
            neural_network_forward(x, w1, b1, w2, b2, **kwargs))
        ref = _reference(x, w1, b1, w2, b2)
        assert out.shape == (B, 3)
        col_sums = jnp.sum(out, axis=0)              # softmax(dim=0) -> 1 per column
        assert bool(jnp.all(jnp.abs(col_sums - 1.0) < 1e-3)), (B, kwargs)
        assert bool(jnp.max(jnp.abs(out - ref)) < 5e-4), (B, kwargs)

    print("KERNEL_OK")
</pallas_src>

<mosaic_0001>
module attributes {stable_mosaic.version = 11 : i64} {
  func.func @kernel(%arg0: i32, %arg1: memref<47xf32, #tpu.memory_space<smem>>, %arg2: memref<7x2x128xf32, #tpu.memory_space<vmem>>, %arg3: memref<3x2x128xf32, #tpu.memory_space<vmem>>) attributes {dimension_semantics = [#tpu.dimension_semantics<arbitrary>], iteration_bounds = array<i64: 1>, scalar_prefetch = 0 : i64, scratch_operands = 0 : i64, tpu.core_type = #tpu.core_type<tc>, window_params = [{transform_indices = @transform_0, window_bounds = array<i64: 47>}, {transform_indices = @transform_1, window_bounds = array<i64: 7, 2, 128>}, {pipeline_mode = #tpu.pipeline_mode<synchronous>, transform_indices = @transform_2, window_bounds = array<i64: 3, 2, 128>}]} {
    %c0 = arith.constant 0 : index
    %c0_0 = arith.constant 0 : index
    %c0_1 = arith.constant 0 : index
    %0 = vector.load %arg2[%c0, %c0_0, %c0_1] : memref<7x2x128xf32, #tpu.memory_space<vmem>>, vector<1x2x128xf32>
    %1 = vector.shape_cast %0 : vector<1x2x128xf32> to vector<2x128xf32>
    %c1 = arith.constant 1 : index
    %c0_2 = arith.constant 0 : index
    %c0_3 = arith.constant 0 : index
    %2 = vector.load %arg2[%c1, %c0_2, %c0_3] : memref<7x2x128xf32, #tpu.memory_space<vmem>>, vector<1x2x128xf32>
    %3 = vector.shape_cast %2 : vector<1x2x128xf32> to vector<2x128xf32>
    %c2 = arith.constant 2 : index
    %c0_4 = arith.constant 0 : index
    %c0_5 = arith.constant 0 : index
    %4 = vector.load %arg2[%c2, %c0_4, %c0_5] : memref<7x2x128xf32, #tpu.memory_space<vmem>>, vector<1x2x128xf32>
    %5 = vector.shape_cast %4 : vector<1x2x128xf32> to vector<2x128xf32>
    %c3 = arith.constant 3 : index
    %c0_6 = arith.constant 0 : index
    %c0_7 = arith.constant 0 : index
    %6 = vector.load %arg2[%c3, %c0_6, %c0_7] : memref<7x2x128xf32, #tpu.memory_space<vmem>>, vector<1x2x128xf32>
    %7 = vector.shape_cast %6 : vector<1x2x128xf32> to vector<2x128xf32>
    %c4 = arith.constant 4 : index
    %c0_8 = arith.constant 0 : index
    %c0_9 = arith.constant 0 : index
    %8 = vector.load %arg2[%c4, %c0_8, %c0_9] : memref<7x2x128xf32, #tpu.memory_space<vmem>>, vector<1x2x128xf32>
    %9 = vector.shape_cast %8 : vector<1x2x128xf32> to vector<2x128xf32>
    %c5 = arith.constant 5 : index
    %c0_10 = arith.constant 0 : index
    %c0_11 = arith.constant 0 : index
    %10 = vector.load %arg2[%c5, %c0_10, %c0_11] : memref<7x2x128xf32, #tpu.memory_space<vmem>>, vector<1x2x128xf32>
    %11 = vector.shape_cast %10 : vector<1x2x128xf32> to vector<2x128xf32>
    %c6 = arith.constant 6 : index
    %c0_12 = arith.constant 0 : index
    %c0_13 = arith.constant 0 : index
    %12 = vector.load %arg2[%c6, %c0_12, %c0_13] : memref<7x2x128xf32, #tpu.memory_space<vmem>>, vector<1x2x128xf32>
    %13 = vector.shape_cast %12 : vector<1x2x128xf32> to vector<2x128xf32>
    %c0_14 = arith.constant 0 : index
    %14 = memref.load %arg1[%c0_14] : memref<47xf32, #tpu.memory_space<smem>>
    %15 = vector.broadcast %14 : f32 to vector<2x128xf32>
    %16 = arith.mulf %1, %15 : vector<2x128xf32>
    %c1_15 = arith.constant 1 : index
    %17 = memref.load %arg1[%c1_15] : memref<47xf32, #tpu.memory_space<smem>>
    %18 = vector.broadcast %17 : f32 to vector<2x128xf32>
    %19 = arith.mulf %3, %18 : vector<2x128xf32>
    %20 = arith.addf %16, %19 : vector<2x128xf32>
    %c2_16 = arith.constant 2 : index
    %21 = memref.load %arg1[%c2_16] : memref<47xf32, #tpu.memory_space<smem>>
    %22 = vector.broadcast %21 : f32 to vector<2x128xf32>
    %23 = arith.mulf %5, %22 : vector<2x128xf32>
    %24 = arith.addf %20, %23 : vector<2x128xf32>
    %c3_17 = arith.constant 3 : index
    %25 = memref.load %arg1[%c3_17] : memref<47xf32, #tpu.memory_space<smem>>
    %26 = vector.broadcast %25 : f32 to vector<2x128xf32>
    %27 = arith.mulf %7, %26 : vector<2x128xf32>
    %28 = arith.addf %24, %27 : vector<2x128xf32>
    %c4_18 = arith.constant 4 : index
    %29 = memref.load %arg1[%c4_18] : memref<47xf32, #tpu.memory_space<smem>>
    %30 = vector.broadcast %29 : f32 to vector<2x128xf32>
    %31 = arith.mulf %9, %30 : vector<2x128xf32>
    %32 = arith.addf %28, %31 : vector<2x128xf32>
    %c5_19 = arith.constant 5 : index
    %33 = memref.load %arg1[%c5_19] : memref<47xf32, #tpu.memory_space<smem>>
    %34 = vector.broadcast %33 : f32 to vector<2x128xf32>
    %35 = arith.mulf %11, %34 : vector<2x128xf32>
    %36 = arith.addf %32, %35 : vector<2x128xf32>
    %c6_20 = arith.constant 6 : index
    %37 = memref.load %arg1[%c6_20] : memref<47xf32, #tpu.memory_space<smem>>
    %38 = vector.broadcast %37 : f32 to vector<2x128xf32>
    %39 = arith.mulf %13, %38 : vector<2x128xf32>
    %40 = arith.addf %36, %39 : vector<2x128xf32>
    %c28 = arith.constant 28 : index
    %41 = memref.load %arg1[%c28] : memref<47xf32, #tpu.memory_space<smem>>
    %42 = vector.broadcast %41 : f32 to vector<2x128xf32>
    %43 = arith.addf %40, %42 : vector<2x128xf32>
    %cst = arith.constant 0.000000e+00 : f32
    %44 = vector.broadcast %cst : f32 to vector<2x128xf32>
    %45 = arith.maximumf %43, %44 : vector<2x128xf32>
    %c7 = arith.constant 7 : index
    %46 = memref.load %arg1[%c7] : memref<47xf32, #tpu.memory_space<smem>>
    %47 = vector.broadcast %46 : f32 to vector<2x128xf32>
    %48 = arith.mulf %1, %47 : vector<2x128xf32>
    %c8 = arith.constant 8 : index
    %49 = memref.load %arg1[%c8] : memref<47xf32, #tpu.memory_space<smem>>
    %50 = vector.broadcast %49 : f32 to vector<2x128xf32>
    %51 = arith.mulf %3, %50 : vector<2x128xf32>
    %52 = arith.addf %48, %51 : vector<2x128xf32>
    %c9 = arith.constant 9 : index
    %53 = memref.load %arg1[%c9] : memref<47xf32, #tpu.memory_space<smem>>
    %54 = vector.broadcast %53 : f32 to vector<2x128xf32>
    %55 = arith.mulf %5, %54 : vector<2x128xf32>
    %56 = arith.addf %52, %55 : vector<2x128xf32>
    %c10 = arith.constant 10 : index
    %57 = memref.load %arg1[%c10] : memref<47xf32, #tpu.memory_space<smem>>
    %58 = vector.broadcast %57 : f32 to vector<2x128xf32>
    %59 = arith.mulf %7, %58 : vector<2x128xf32>
    %60 = arith.addf %56, %59 : vector<2x128xf32>
    %c11 = arith.constant 11 : index
    %61 = memref.load %arg1[%c11] : memref<47xf32, #tpu.memory_space<smem>>
    %62 = vector.broadcast %61 : f32 to vector<2x128xf32>
    %63 = arith.mulf %9, %62 : vector<2x128xf32>
    %64 = arith.addf %60, %63 : vector<2x128xf32>
    %c12 = arith.constant 12 : index
    %65 = memref.load %arg1[%c12] : memref<47xf32, #tpu.memory_space<smem>>
    %66 = vector.broadcast %65 : f32 to vector<2x128xf32>
    %67 = arith.mulf %11, %66 : vector<2x128xf32>
    %68 = arith.addf %64, %67 : vector<2x128xf32>
    %c13 = arith.constant 13 : index
    %69 = memref.load %arg1[%c13] : memref<47xf32, #tpu.memory_space<smem>>
    %70 = vector.broadcast %69 : f32 to vector<2x128xf32>
    %71 = arith.mulf %13, %70 : vector<2x128xf32>
    %72 = arith.addf %68, %71 : vector<2x128xf32>
    %c29 = arith.constant 29 : index
    %73 = memref.load %arg1[%c29] : memref<47xf32, #tpu.memory_space<smem>>
    %74 = vector.broadcast %73 : f32 to vector<2x128xf32>
    %75 = arith.addf %72, %74 : vector<2x128xf32>
    %cst_21 = arith.constant 0.000000e+00 : f32
    %76 = vector.broadcast %cst_21 : f32 to vector<2x128xf32>
    %77 = arith.maximumf %75, %76 : vector<2x128xf32>
    %c14 = arith.constant 14 : index
    %78 = memref.load %arg1[%c14] : memref<47xf32, #tpu.memory_space<smem>>
    %79 = vector.broadcast %78 : f32 to vector<2x128xf32>
    %80 = arith.mulf %1, %79 : vector<2x128xf32>
    %c15 = arith.constant 15 : index
    %81 = memref.load %arg1[%c15] : memref<47xf32, #tpu.memory_space<smem>>
    %82 = vector.broadcast %81 : f32 to vector<2x128xf32>
    %83 = arith.mulf %3, %82 : vector<2x128xf32>
    %84 = arith.addf %80, %83 : vector<2x128xf32>
    %c16 = arith.constant 16 : index
    %85 = memref.load %arg1[%c16] : memref<47xf32, #tpu.memory_space<smem>>
    %86 = vector.broadcast %85 : f32 to vector<2x128xf32>
    %87 = arith.mulf %5, %86 : vector<2x128xf32>
    %88 = arith.addf %84, %87 : vector<2x128xf32>
    %c17 = arith.constant 17 : index
    %89 = memref.load %arg1[%c17] : memref<47xf32, #tpu.memory_space<smem>>
    %90 = vector.broadcast %89 : f32 to vector<2x128xf32>
    %91 = arith.mulf %7, %90 : vector<2x128xf32>
    %92 = arith.addf %88, %91 : vector<2x128xf32>
    %c18 = arith.constant 18 : index
    %93 = memref.load %arg1[%c18] : memref<47xf32, #tpu.memory_space<smem>>
    %94 = vector.broadcast %93 : f32 to vector<2x128xf32>
    %95 = arith.mulf %9, %94 : vector<2x128xf32>
    %96 = arith.addf %92, %95 : vector<2x128xf32>
    %c19 = arith.constant 19 : index
    %97 = memref.load %arg1[%c19] : memref<47xf32, #tpu.memory_space<smem>>
    %98 = vector.broadcast %97 : f32 to vector<2x128xf32>
    %99 = arith.mulf %11, %98 : vector<2x128xf32>
    %100 = arith.addf %96, %99 : vector<2x128xf32>
    %c20 = arith.constant 20 : index
    %101 = memref.load %arg1[%c20] : memref<47xf32, #tpu.memory_space<smem>>
    %102 = vector.broadcast %101 : f32 to vector<2x128xf32>
    %103 = arith.mulf %13, %102 : vector<2x128xf32>
    %104 = arith.addf %100, %103 : vector<2x128xf32>
    %c30 = arith.constant 30 : index
    %105 = memref.load %arg1[%c30] : memref<47xf32, #tpu.memory_space<smem>>
    %106 = vector.broadcast %105 : f32 to vector<2x128xf32>
    %107 = arith.addf %104, %106 : vector<2x128xf32>
    %cst_22 = arith.constant 0.000000e+00 : f32
    %108 = vector.broadcast %cst_22 : f32 to vector<2x128xf32>
    %109 = arith.maximumf %107, %108 : vector<2x128xf32>
    %c21 = arith.constant 21 : index
    %110 = memref.load %arg1[%c21] : memref<47xf32, #tpu.memory_space<smem>>
    %111 = vector.broadcast %110 : f32 to vector<2x128xf32>
    %112 = arith.mulf %1, %111 : vector<2x128xf32>
    %c22 = arith.constant 22 : index
    %113 = memref.load %arg1[%c22] : memref<47xf32, #tpu.memory_space<smem>>
    %114 = vector.broadcast %113 : f32 to vector<2x128xf32>
    %115 = arith.mulf %3, %114 : vector<2x128xf32>
    %116 = arith.addf %112, %115 : vector<2x128xf32>
    %c23 = arith.constant 23 : index
    %117 = memref.load %arg1[%c23] : memref<47xf32, #tpu.memory_space<smem>>
    %118 = vector.broadcast %117 : f32 to vector<2x128xf32>
    %119 = arith.mulf %5, %118 : vector<2x128xf32>
    %120 = arith.addf %116, %119 : vector<2x128xf32>
    %c24 = arith.constant 24 : index
    %121 = memref.load %arg1[%c24] : memref<47xf32, #tpu.memory_space<smem>>
    %122 = vector.broadcast %121 : f32 to vector<2x128xf32>
    %123 = arith.mulf %7, %122 : vector<2x128xf32>
    %124 = arith.addf %120, %123 : vector<2x128xf32>
    %c25 = arith.constant 25 : index
    %125 = memref.load %arg1[%c25] : memref<47xf32, #tpu.memory_space<smem>>
    %126 = vector.broadcast %125 : f32 to vector<2x128xf32>
    %127 = arith.mulf %9, %126 : vector<2x128xf32>
    %128 = arith.addf %124, %127 : vector<2x128xf32>
    %c26 = arith.constant 26 : index
    %129 = memref.load %arg1[%c26] : memref<47xf32, #tpu.memory_space<smem>>
    %130 = vector.broadcast %129 : f32 to vector<2x128xf32>
    %131 = arith.mulf %11, %130 : vector<2x128xf32>
    %132 = arith.addf %128, %131 : vector<2x128xf32>
    %c27 = arith.constant 27 : index
    %133 = memref.load %arg1[%c27] : memref<47xf32, #tpu.memory_space<smem>>
    %134 = vector.broadcast %133 : f32 to vector<2x128xf32>
    %135 = arith.mulf %13, %134 : vector<2x128xf32>
    %136 = arith.addf %132, %135 : vector<2x128xf32>
    %c31 = arith.constant 31 : index
    %137 = memref.load %arg1[%c31] : memref<47xf32, #tpu.memory_space<smem>>
    %138 = vector.broadcast %137 : f32 to vector<2x128xf32>
    %139 = arith.addf %136, %138 : vector<2x128xf32>
    %cst_23 = arith.constant 0.000000e+00 : f32
    %140 = vector.broadcast %cst_23 : f32 to vector<2x128xf32>
    %141 = arith.maximumf %139, %140 : vector<2x128xf32>
    %c32 = arith.constant 32 : index
    %142 = memref.load %arg1[%c32] : memref<47xf32, #tpu.memory_space<smem>>
    %143 = vector.broadcast %142 : f32 to vector<2x128xf32>
    %144 = arith.mulf %45, %143 : vector<2x128xf32>
    %c33 = arith.constant 33 : index
    %145 = memref.load %arg1[%c33] : memref<47xf32, #tpu.memory_space<smem>>
    %146 = vector.broadcast %145 : f32 to vector<2x128xf32>
    %147 = arith.mulf %77, %146 : vector<2x128xf32>
    %148 = arith.addf %144, %147 : vector<2x128xf32>
    %c34 = arith.constant 34 : index
    %149 = memref.load %arg1[%c34] : memref<47xf32, #tpu.memory_space<smem>>
    %150 = vector.broadcast %149 : f32 to vector<2x128xf32>
    %151 = arith.mulf %109, %150 : vector<2x128xf32>
    %152 = arith.addf %148, %151 : vector<2x128xf32>
    %c35 = arith.constant 35 : index
    %153 = memref.load %arg1[%c35] : memref<47xf32, #tpu.memory_space<smem>>
    %154 = vector.broadcast %153 : f32 to vector<2x128xf32>
    %155 = arith.mulf %141, %154 : vector<2x128xf32>
    %156 = arith.addf %152, %155 : vector<2x128xf32>
    %c44 = arith.constant 44 : index
    %157 = memref.load %arg1[%c44] : memref<47xf32, #tpu.memory_space<smem>>
    %158 = vector.broadcast %157 : f32 to vector<2x128xf32>
    %159 = arith.addf %156, %158 : vector<2x128xf32>
    %c36 = arith.constant 36 : index
    %160 = memref.load %arg1[%c36] : memref<47xf32, #tpu.memory_space<smem>>
    %161 = vector.broadcast %160 : f32 to vector<2x128xf32>
    %162 = arith.mulf %45, %161 : vector<2x128xf32>
    %c37 = arith.constant 37 : index
    %163 = memref.load %arg1[%c37] : memref<47xf32, #tpu.memory_space<smem>>
    %164 = vector.broadcast %163 : f32 to vector<2x128xf32>
    %165 = arith.mulf %77, %164 : vector<2x128xf32>
    %166 = arith.addf %162, %165 : vector<2x128xf32>
    %c38 = arith.constant 38 : index
    %167 = memref.load %arg1[%c38] : memref<47xf32, #tpu.memory_space<smem>>
    %168 = vector.broadcast %167 : f32 to vector<2x128xf32>
    %169 = arith.mulf %109, %168 : vector<2x128xf32>
    %170 = arith.addf %166, %169 : vector<2x128xf32>
    %c39 = arith.constant 39 : index
    %171 = memref.load %arg1[%c39] : memref<47xf32, #tpu.memory_space<smem>>
    %172 = vector.broadcast %171 : f32 to vector<2x128xf32>
    %173 = arith.mulf %141, %172 : vector<2x128xf32>
    %174 = arith.addf %170, %173 : vector<2x128xf32>
    %c45 = arith.constant 45 : index
    %175 = memref.load %arg1[%c45] : memref<47xf32, #tpu.memory_space<smem>>
    %176 = vector.broadcast %175 : f32 to vector<2x128xf32>
    %177 = arith.addf %174, %176 : vector<2x128xf32>
    %c40 = arith.constant 40 : index
    %178 = memref.load %arg1[%c40] : memref<47xf32, #tpu.memory_space<smem>>
    %179 = vector.broadcast %178 : f32 to vector<2x128xf32>
    %180 = arith.mulf %45, %179 : vector<2x128xf32>
    %c41 = arith.constant 41 : index
    %181 = memref.load %arg1[%c41] : memref<47xf32, #tpu.memory_space<smem>>
    %182 = vector.broadcast %181 : f32 to vector<2x128xf32>
    %183 = arith.mulf %77, %182 : vector<2x128xf32>
    %184 = arith.addf %180, %183 : vector<2x128xf32>
    %c42 = arith.constant 42 : index
    %185 = memref.load %arg1[%c42] : memref<47xf32, #tpu.memory_space<smem>>
    %186 = vector.broadcast %185 : f32 to vector<2x128xf32>
    %187 = arith.mulf %109, %186 : vector<2x128xf32>
    %188 = arith.addf %184, %187 : vector<2x128xf32>
    %c43 = arith.constant 43 : index
    %189 = memref.load %arg1[%c43] : memref<47xf32, #tpu.memory_space<smem>>
    %190 = vector.broadcast %189 : f32 to vector<2x128xf32>
    %191 = arith.mulf %141, %190 : vector<2x128xf32>
    %192 = arith.addf %188, %191 : vector<2x128xf32>
    %c46 = arith.constant 46 : index
    %193 = memref.load %arg1[%c46] : memref<47xf32, #tpu.memory_space<smem>>
    %194 = vector.broadcast %193 : f32 to vector<2x128xf32>
    %195 = arith.addf %192, %194 : vector<2x128xf32>
    %196 = tpu.iota {dimensions = array<i32: 0>} : vector<2x128xi32>
    %197 = tpu.iota {dimensions = array<i32: 1>} : vector<2x128xi32>
    %c128_i32 = arith.constant 128 : i32
    %198 = vector.broadcast %c128_i32 : i32 to vector<2x128xi32>
    %199 = arith.muli %196, %198 : vector<2x128xi32>
    %200 = arith.addi %199, %197 : vector<2x128xi32>
    %c200_i32 = arith.constant 200 : i32
    %201 = vector.broadcast %c200_i32 : i32 to vector<2x128xi32>
    %202 = arith.cmpi slt, %200, %201 : vector<2x128xi32>
    %cst_24 = arith.constant 0xFF800000 : f32
    %203 = vector.broadcast %cst_24 : f32 to vector<2x128xf32>
    %204 = arith.select %202, %159, %203 : vector<2x128xi1>, vector<2x128xf32>
    %cst_25 = arith.constant dense<0xFF800000> : vector<2xf32>
    %205 = vector.multi_reduction <maximumf>, %204, %cst_25 [1] : vector<2x128xf32> to vector<2xf32>
    %206 = vector.shape_cast %205 : vector<2xf32> to vector<2x1xf32>
    %cst_26 = arith.constant dense<0xFF800000> : vector<1xf32>
    %207 = vector.multi_reduction <maximumf>, %206, %cst_26 [0] : vector<2x1xf32> to vector<1xf32>
    %208 = vector.shape_cast %207 : vector<1xf32> to vector<1x1xf32>
    %209 = vector.broadcast %208 : vector<1x1xf32> to vector<2x128xf32>
    %210 = arith.subf %204, %209 : vector<2x128xf32>
    %211 = math.exp %210 : vector<2x128xf32>
    %cst_27 = arith.constant dense<0.000000e+00> : vector<2xf32>
    %212 = vector.multi_reduction <add>, %211, %cst_27 [1] : vector<2x128xf32> to vector<2xf32>
    %213 = vector.shape_cast %212 : vector<2xf32> to vector<2x1xf32>
    %cst_28 = arith.constant dense<0.000000e+00> : vector<1xf32>
    %214 = vector.multi_reduction <add>, %213, %cst_28 [0] : vector<2x1xf32> to vector<1xf32>
    %215 = vector.shape_cast %214 : vector<1xf32> to vector<1x1xf32>
    %cst_29 = arith.constant 1.000000e+00 : f32
    %216 = vector.broadcast %cst_29 : f32 to vector<1x1xf32>
    %217 = arith.divf %216, %215 : vector<1x1xf32>
    %218 = vector.broadcast %217 : vector<1x1xf32> to vector<2x128xf32>
    %219 = arith.mulf %211, %218 : vector<2x128xf32>
    %c0_30 = arith.constant 0 : index
    %c0_31 = arith.constant 0 : index
    %c0_32 = arith.constant 0 : index
    %220 = vector.load %arg3[%c0_30, %c0_31, %c0_32] : memref<3x2x128xf32, #tpu.memory_space<vmem>>, vector<1x2x128xf32>
    %221 = vector.shape_cast %220 : vector<1x2x128xf32> to vector<2x128xf32>
    %222 = vector.shape_cast %219 : vector<2x128xf32> to vector<1x2x128xf32>
    tpu.vector_store %arg3[%c0_30, %c0_31, %c0_32], %222 {strides = array<i32>} : memref<3x2x128xf32, #tpu.memory_space<vmem>>, vector<1x2x128xf32>,
    %cst_33 = arith.constant 0xFF800000 : f32
    %223 = vector.broadcast %cst_33 : f32 to vector<2x128xf32>
    %224 = arith.select %202, %177, %223 : vector<2x128xi1>, vector<2x128xf32>
    %cst_34 = arith.constant dense<0xFF800000> : vector<2xf32>
    %225 = vector.multi_reduction <maximumf>, %224, %cst_34 [1] : vector<2x128xf32> to vector<2xf32>
    %226 = vector.shape_cast %225 : vector<2xf32> to vector<2x1xf32>
    %cst_35 = arith.constant dense<0xFF800000> : vector<1xf32>
    %227 = vector.multi_reduction <maximumf>, %226, %cst_35 [0] : vector<2x1xf32> to vector<1xf32>
    %228 = vector.shape_cast %227 : vector<1xf32> to vector<1x1xf32>
    %229 = vector.broadcast %228 : vector<1x1xf32> to vector<2x128xf32>
    %230 = arith.subf %224, %229 : vector<2x128xf32>
    %231 = math.exp %230 : vector<2x128xf32>
    %cst_36 = arith.constant dense<0.000000e+00> : vector<2xf32>
    %232 = vector.multi_reduction <add>, %231, %cst_36 [1] : vector<2x128xf32> to vector<2xf32>
    %233 = vector.shape_cast %232 : vector<2xf32> to vector<2x1xf32>
    %cst_37 = arith.constant dense<0.000000e+00> : vector<1xf32>
    %234 = vector.multi_reduction <add>, %233, %cst_37 [0] : vector<2x1xf32> to vector<1xf32>
    %235 = vector.shape_cast %234 : vector<1xf32> to vector<1x1xf32>
    %cst_38 = arith.constant 1.000000e+00 : f32
    %236 = vector.broadcast %cst_38 : f32 to vector<1x1xf32>
    %237 = arith.divf %236, %235 : vector<1x1xf32>
    %238 = vector.broadcast %237 : vector<1x1xf32> to vector<2x128xf32>
    %239 = arith.mulf %231, %238 : vector<2x128xf32>
    %c1_39 = arith.constant 1 : index
    %c0_40 = arith.constant 0 : index
    %c0_41 = arith.constant 0 : index
    %240 = vector.load %arg3[%c1_39, %c0_40, %c0_41] : memref<3x2x128xf32, #tpu.memory_space<vmem>>, vector<1x2x128xf32>
    %241 = vector.shape_cast %240 : vector<1x2x128xf32> to vector<2x128xf32>
    %242 = vector.shape_cast %239 : vector<2x128xf32> to vector<1x2x128xf32>
    tpu.vector_store %arg3[%c1_39, %c0_40, %c0_41], %242 {strides = array<i32>} : memref<3x2x128xf32, #tpu.memory_space<vmem>>, vector<1x2x128xf32>,
    %cst_42 = arith.constant 0xFF800000 : f32
    %243 = vector.broadcast %cst_42 : f32 to vector<2x128xf32>
    %244 = arith.select %202, %195, %243 : vector<2x128xi1>, vector<2x128xf32>
    %cst_43 = arith.constant dense<0xFF800000> : vector<2xf32>
    %245 = vector.multi_reduction <maximumf>, %244, %cst_43 [1] : vector<2x128xf32> to vector<2xf32>
    %246 = vector.shape_cast %245 : vector<2xf32> to vector<2x1xf32>
    %cst_44 = arith.constant dense<0xFF800000> : vector<1xf32>
    %247 = vector.multi_reduction <maximumf>, %246, %cst_44 [0] : vector<2x1xf32> to vector<1xf32>
    %248 = vector.shape_cast %247 : vector<1xf32> to vector<1x1xf32>
    %249 = vector.broadcast %248 : vector<1x1xf32> to vector<2x128xf32>
    %250 = arith.subf %244, %249 : vector<2x128xf32>
    %251 = math.exp %250 : vector<2x128xf32>
    %cst_45 = arith.constant dense<0.000000e+00> : vector<2xf32>
    %252 = vector.multi_reduction <add>, %251, %cst_45 [1] : vector<2x128xf32> to vector<2xf32>
    %253 = vector.shape_cast %252 : vector<2xf32> to vector<2x1xf32>
    %cst_46 = arith.constant dense<0.000000e+00> : vector<1xf32>
    %254 = vector.multi_reduction <add>, %253, %cst_46 [0] : vector<2x1xf32> to vector<1xf32>
    %255 = vector.shape_cast %254 : vector<1xf32> to vector<1x1xf32>
    %cst_47 = arith.constant 1.000000e+00 : f32
    %256 = vector.broadcast %cst_47 : f32 to vector<1x1xf32>
    %257 = arith.divf %256, %255 : vector<1x1xf32>
    %258 = vector.broadcast %257 : vector<1x1xf32> to vector<2x128xf32>
    %259 = arith.mulf %251, %258 : vector<2x128xf32>
    %c2_48 = arith.constant 2 : index
    %c0_49 = arith.constant 0 : index
    %c0_50 = arith.constant 0 : index
    %260 = vector.load %arg3[%c2_48, %c0_49, %c0_50] : memref<3x2x128xf32, #tpu.memory_space<vmem>>, vector<1x2x128xf32>
    %261 = vector.shape_cast %260 : vector<1x2x128xf32> to vector<2x128xf32>
    %262 = vector.shape_cast %259 : vector<2x128xf32> to vector<1x2x128xf32>
    tpu.vector_store %arg3[%c2_48, %c0_49, %c0_50], %262 {strides = array<i32>} : memref<3x2x128xf32, #tpu.memory_space<vmem>>, vector<1x2x128xf32>,
    return
  }
  func.func @transform_0(%arg0: i32) -> i32 {
    %c0_i32 = arith.constant 0 : i32
    %c0_i32_0 = arith.constant 0 : i32
    return %c0_i32 : i32
  }
  func.func @transform_1(%arg0: i32) -> (i32, i32, i32) {
    %c0_i32 = arith.constant 0 : i32
    %c0_i32_0 = arith.constant 0 : i32
    %c0_i32_1 = arith.constant 0 : i32
    return %c0_i32, %arg0, %c0_i32_0 : i32, i32, i32
  }
  func.func @transform_2(%arg0: i32) -> (i32, i32, i32) {
    %c0_i32 = arith.constant 0 : i32
    %c0_i32_0 = arith.constant 0 : i32
    %c0_i32_1 = arith.constant 0 : i32
    %c0_i32_2 = arith.constant 0 : i32
    return %c0_i32, %c0_i32_0, %c0_i32_1 : i32, i32, i32
  }
}

</mosaic_0001>

<llo_original>
// kernel: tpu_custom_call.1
$region0: #{tpu_custom_call.1}
  #allocation0 [shape = 'u32[]', space=smem, size = 0x4, offset = 0x4, fixed_abs, tag = 'smem constant byte address 0x4 - core index']
  #allocation1 [shape = 'u32[144,128]{1,0:T(1,128)}', space=vmem, size = 0x12000, scoped, tag = 'internal scratch']
  %s0 = inlined_call_operand.hbm [shape: f32[47], index: 0, kind: input, shape index: {}]
  %s1 = inlined_call_operand.hbm [shape: f32[7,2,128], index: 1, kind: input, shape index: {}]
  %s2 = inlined_call_operand.hbm [shape: f32[3,2,128], index: 2, kind: output, shape index: {}]
  %s3 = sld [smem:[#allocation0]]
  $region26: #{tpu_custom_call.1} parent=0
    _
  %s5 = ssub.s32 1, %s3
  %s6 = scalar_select 0, %s5, %s3
  $region1: #{tpu_custom_call.1} parent=0
    #allocation2 [shape = 'u8[512]{0}', space=smem, size = 0x200, scoped, tag = 'input window, operand 0, single buffered']
    #allocation3 [shape = 's32[1]{0}', space=sflag, size = 0x4, scoped, tag = 'scoped memory for tpu_custom_call.1']
    #allocation4 [shape = 's32[1]{0}', space=sflag, size = 0x4, scoped, tag = 'scoped memory for tpu_custom_call.1']
    #allocation5 [shape = 's32[1]{0}', space=sflag, size = 0x4, scoped, tag = 'scoped memory for tpu_custom_call.1']
    #allocation6 [shape = 'u8[7168]{0}', space=vmem, size = 0x1c00, scoped, tag = 'input window, operand 1, single buffered']
    #allocation7 [shape = 'u8[3072]{0}', space=vmem, size = 0xc00, scoped, tag = 'output window, operand 0, single buffered']
    %7 = vsyncpa [#allocation5], 0
    %8 = vsyncpa [#allocation3], 0
    %9 = vsyncpa [#allocation4], 0
    // Predicated region
    $region2: #{tpu_custom_call.1} parent=1 // pred_check
      _
    $region3: #{tpu_custom_call.1} parent=1 // pred_check_branch
      %11 = sbr.rel (0) target = $region5
    $region4: #{tpu_custom_call.1} parent=1 // pred_region
      %s13 = ssub.s32 16, 16
      %14 = vsyncadd [#allocation5], %s13
      %17 = dma.hbm_to_smem %s0, 16, [#allocation2], [#allocation5]
    $region5: #{tpu_custom_call.1} parent=1 // pred_fallthru
      _
    // Predicated region
    $region6: #{tpu_custom_call.1} parent=1 // pred_check
      _
    $region7: #{tpu_custom_call.1} parent=1 // pred_check_branch
      %19 = sbr.rel (0) target = $region9
    $region8: #{tpu_custom_call.1} parent=1 // pred_region
      %s21 = ssub.s32 224, 224
      %22 = vsyncadd [#allocation3], %s21
      %s23 = sshll.u32 [#allocation6], 4
      %s24 = int_to_ptr.vmem [resolvable:$true] %s23
      %29 = dma.hbm_to_vmem [thread:$0]  %s1, 224, %s24, [#allocation3], 32, 32, 2
    $region9: #{tpu_custom_call.1} parent=1 // pred_fallthru
      _
    // Predicated region
    $region10: #{tpu_custom_call.1} parent=1 // pred_check
      _
    $region11: #{tpu_custom_call.1} parent=1 // pred_check_branch
      %31 = sbr.rel (0) target = $region13
    $region12: #{tpu_custom_call.1} parent=1 // pred_region
      %32 = dma.done [#allocation5], 16
    $region13: #{tpu_custom_call.1} parent=1 // pred_fallthru
      _
    // Predicated region
    $region14: #{tpu_custom_call.1} parent=1 // pred_check
      _
    $region15: #{tpu_custom_call.1} parent=1 // pred_check_branch
      %34 = sbr.rel (0) target = $region17
    $region16: #{tpu_custom_call.1} parent=1 // pred_region
      %35 = dma.done [#allocation3], 224
    $region17: #{tpu_custom_call.1} parent=1 // pred_fallthru
      _
    %36 = sfence
    %v37 = vld [vmem:[#allocation6] sm:$0x3]
    %s38 = scalar_lea.vmem [#allocation6], 2
    %v39 = vld [vmem:[%s38] sm:$0x3]
    %s40 = scalar_lea.vmem [#allocation6], 4
    %v41 = vld [vmem:[%s40] sm:$0x3]
    %s42 = scalar_lea.vmem [#allocation6], 6
    %v43 = vld [vmem:[%s42] sm:$0x3]
    %s44 = scalar_lea.vmem [#allocation6], 8
    %v45 = vld [vmem:[%s44] sm:$0x3]
    %s46 = scalar_lea.vmem [#allocation6], 10
    %v47 = vld [vmem:[%s46] sm:$0x3]
    %s48 = scalar_lea.vmem [#allocation6], 12
    %v49 = vld [vmem:[%s48] sm:$0x3]
    %s50 = sld [smem:[#allocation2]]
    %v51 = vstv %s50
    %v52 = vmul.f32 %v37, %v51
    %s53 = sld [smem:[#allocation2 + $0x1]]
    %v54 = vstv %s53
    %v55 = vmul.f32 %v39, %v54
    %v56 = vadd.f32 %v52, %v55
    %s57 = sld [smem:[#allocation2 + $0x2]]
    %v58 = vstv %s57
    %v59 = vmul.f32 %v41, %v58
    %v60 = vadd.f32 %v56, %v59
    %s61 = sld [smem:[#allocation2 + $0x3]]
    %v62 = vstv %s61
    %v63 = vmul.f32 %v43, %v62
    %v64 = vadd.f32 %v60, %v63
    %s65 = sld [smem:[#allocation2 + $0x4]]
    %v66 = vstv %s65
    %v67 = vmul.f32 %v45, %v66
    %v68 = vadd.f32 %v64, %v67
    %s69 = sld [smem:[#allocation2 + $0x5]]
    %v70 = vstv %s69
    %v71 = vmul.f32 %v47, %v70
    %v72 = vadd.f32 %v68, %v71
    %s73 = sld [smem:[#allocation2 + $0x6]]
    %v74 = vstv %s73
    %v75 = vmul.f32 %v49, %v74
    %v76 = vadd.f32 %v72, %v75
    %s77 = sld [smem:[#allocation2 + $0x1c]]
    %v78 = vstv %s77
    %v79 = vadd.f32 %v76, %v78
    %v80 = vmax.f32 %v79, 0.0
    %s81 = sld [smem:[#allocation2 + $0x7]]
    %v82 = vstv %s81
    %v83 = vmul.f32 %v37, %v82
    %s84 = sld [smem:[#allocation2 + $0x8]]
    %v85 = vstv %s84
    %v86 = vmul.f32 %v39, %v85
    %v87 = vadd.f32 %v83, %v86
    %s88 = sld [smem:[#allocation2 + $0x9]]
    %v89 = vstv %s88
    %v90 = vmul.f32 %v41, %v89
    %v91 = vadd.f32 %v87, %v90
    %s92 = sld [smem:[#allocation2 + $0xa]]
    %v93 = vstv %s92
    %v94 = vmul.f32 %v43, %v93
    %v95 = vadd.f32 %v91, %v94
    %s96 = sld [smem:[#allocation2 + $0xb]]
    %v97 = vstv %s96
    %v98 = vmul.f32 %v45, %v97
    %v99 = vadd.f32 %v95, %v98
    %s100 = sld [smem:[#allocation2 + $0xc]]
    %v101 = vstv %s100
    %v102 = vmul.f32 %v47, %v101
    %v103 = vadd.f32 %v99, %v102
    %s104 = sld [smem:[#allocation2 + $0xd]]
    %v105 = vstv %s104
    %v106 = vmul.f32 %v49, %v105
    %v107 = vadd.f32 %v103, %v106
    %s108 = sld [smem:[#allocation2 + $0x1d]]
    %v109 = vstv %s108
    %v110 = vadd.f32 %v107, %v109
    %v111 = vmax.f32 %v110, 0.0
    %s112 = sld [smem:[#allocation2 + $0xe]]
    %v113 = vstv %s112
    %v114 = vmul.f32 %v37, %v113
    %s115 = sld [smem:[#allocation2 + $0xf]]
    %v116 = vstv %s115
    %v117 = vmul.f32 %v39, %v116
    %v118 = vadd.f32 %v114, %v117
    %s119 = sld [smem:[#allocation2 + $0x10]]
    %v120 = vstv %s119
    %v121 = vmul.f32 %v41, %v120
    %v122 = vadd.f32 %v118, %v121
    %s123 = sld [smem:[#allocation2 + $0x11]]
    %v124 = vstv %s123
    %v125 = vmul.f32 %v43, %v124
    %v126 = vadd.f32 %v122, %v125
    %s127 = sld [smem:[#allocation2 + $0x12]]
    %v128 = vstv %s127
    %v129 = vmul.f32 %v45, %v128
    %v130 = vadd.f32 %v126, %v129
    %s131 = sld [smem:[#allocation2 + $0x13]]
    %v132 = vstv %s131
    %v133 = vmul.f32 %v47, %v132
    %v134 = vadd.f32 %v130, %v133
    %s135 = sld [smem:[#allocation2 + $0x14]]
    %v136 = vstv %s135
    %v137 = vmul.f32 %v49, %v136
    %v138 = vadd.f32 %v134, %v137
    %s139 = sld [smem:[#allocation2 + $0x1e]]
    %v140 = vstv %s139
    %v141 = vadd.f32 %v138, %v140
    %v142 = vmax.f32 %v141, 0.0
    %s143 = sld [smem:[#allocation2 + $0x15]]
    %v144 = vstv %s143
    %v145 = vmul.f32 %v37, %v144
    %s146 = sld [smem:[#allocation2 + $0x16]]
    %v147 = vstv %s146
    %v148 = vmul.f32 %v39, %v147
    %v149 = vadd.f32 %v145, %v148
    %s150 = sld [smem:[#allocation2 + $0x17]]
    %v151 = vstv %s150
    %v152 = vmul.f32 %v41, %v151
    %v153 = vadd.f32 %v149, %v152
    %s154 = sld [smem:[#allocation2 + $0x18]]
    %v155 = vstv %s154
    %v156 = vmul.f32 %v43, %v155
    %v157 = vadd.f32 %v153, %v156
    %s158 = sld [smem:[#allocation2 + $0x19]]
    %v159 = vstv %s158
    %v160 = vmul.f32 %v45, %v159
    %v161 = vadd.f32 %v157, %v160
    %s162 = sld [smem:[#allocation2 + $0x1a]]
    %v163 = vstv %s162
    %v164 = vmul.f32 %v47, %v163
    %v165 = vadd.f32 %v161, %v164
    %s166 = sld [smem:[#allocation2 + $0x1b]]
    %v167 = vstv %s166
    %v168 = vmul.f32 %v49, %v167
    %v169 = vadd.f32 %v165, %v168
    %s170 = sld [smem:[#allocation2 + $0x1f]]
    %v171 = vstv %s170
    %v172 = vadd.f32 %v169, %v171
    %v173 = vmax.f32 %v172, 0.0
    %s174 = sld [smem:[#allocation2 + $0x20]]
    %v175 = vstv %s174
    %v176 = vmul.f32 %v80, %v175
    %s177 = sld [smem:[#allocation2 + $0x21]]
    %v178 = vstv %s177
    %v179 = vmul.f32 %v111, %v178
    %v180 = vadd.f32 %v176, %v179
    %s181 = sld [smem:[#allocation2 + $0x22]]
    %v182 = vstv %s181
    %v183 = vmul.f32 %v142, %v182
    %v184 = vadd.f32 %v180, %v183
    %s185 = sld [smem:[#allocation2 + $0x23]]
    %v186 = vstv %s185
    %v187 = vmul.f32 %v173, %v186
    %v188 = vadd.f32 %v184, %v187
    %s189 = sld [smem:[#allocation2 + $0x2c]]
    %v190 = vstv %s189
    %v191 = vadd.f32 %v188, %v190
    %s192 = sld [smem:[#allocation2 + $0x24]]
    %v193 = vstv %s192
    %v194 = vmul.f32 %v80, %v193
    %s195 = sld [smem:[#allocation2 + $0x25]]
    %v196 = vstv %s195
    %v197 = vmul.f32 %v111, %v196
    %v198 = vadd.f32 %v194, %v197
    %s199 = sld [smem:[#allocation2 + $0x26]]
    %v200 = vstv %s199
    %v201 = vmul.f32 %v142, %v200
    %v202 = vadd.f32 %v198, %v201
    %s203 = sld [smem:[#allocation2 + $0x27]]
    %v204 = vstv %s203
    %v205 = vmul.f32 %v173, %v204
    %v206 = vadd.f32 %v202, %v205
    %s207 = sld [smem:[#allocation2 + $0x2d]]
    %v208 = vstv %s207
    %v209 = vadd.f32 %v206, %v208
    %s210 = sld [smem:[#allocation2 + $0x28]]
    %v211 = vstv %s210
    %v212 = vmul.f32 %v80, %v211
    %s213 = sld [smem:[#allocation2 + $0x29]]
    %v214 = vstv %s213
    %v215 = vmul.f32 %v111, %v214
    %v216 = vadd.f32 %v212, %v215
    %s217 = sld [smem:[#allocation2 + $0x2a]]
    %v218 = vstv %s217
    %v219 = vmul.f32 %v142, %v218
    %v220 = vadd.f32 %v216, %v219
    %s221 = sld [smem:[#allocation2 + $0x2b]]
    %v222 = vstv %s221
    %v223 = vmul.f32 %v173, %v222
    %v224 = vadd.f32 %v220, %v223
    %s225 = sld [smem:[#allocation2 + $0x2e]]
    %v226 = vstv %s225
    %v227 = vadd.f32 %v224, %v226
    %v228 = vlaneseq
    %v229 = vshrl.u32 %v228, 7
    %v230 = vlaneseq
    %v231 = vand.u32 %v230, 127
    %v232 = vmul.u32 %v229, 128
    %v233 = vadd.s32 %v232, %v231
    %vm234 = vcmp.lt.s32.totalorder %v233, 200
    %v235 = vsel %vm234, %v191, -inf
    %vm236 = vcmask 1041408
    %v237 = vsel %vm236, %v235, -inf
    %238 = vmax.xlane.f32.xlu0 %v237
    %v239 = vpop.xlane.xlu0 %238
    %v240 = vsel %vm236, %v239, -inf
    %v241 = vrot.slane %v240, 4
    %v242 = vmax.f32 %v240, %v241
    %v243 = vrot.slane %v242, 2
    %v244 = vmax.f32 %v242, %v243
    %v245 = vrot.slane %v244, 1
    %v246 = vmax.f32 %v244, %v245
    %v247 = vsub.f32 %v235, %v246
    %v248 = vmul.f32 %v247, 1.442695
    %v249 = vpow.pop %v248
    %v250 = vsel %vm236, %v249, 0.0
    %251 = vadd.xlane.f32.xlu0 %v250
    %v252 = vpop.xlane.xlu0 %251
    %v253 = vsel %vm236, %v252, 0.0
    %v254 = vrot.slane %v253, 4
    %v255 = vadd.f32 %v253, %v254
    %v256 = vrot.slane %v255, 2
    %v257 = vadd.f32 %v255, %v256
    %v258 = vrot.slane %v257, 1
    %v259 = vadd.f32 %v257, %v258
    %v260 = vrcp.pop %v259
    %v261 = vmul.f32 1.0, %v260
    %v262 = vmul.f32 %v249, %v261
    %263 = vst [vmem:[#allocation7] sm:$0x3] %v262
    %v264 = vsel %vm234, %v209, -inf
    %v265 = vsel %vm236, %v264, -inf
    %266 = vmax.xlane.f32.xlu0 %v265
    %v267 = vpop.xlane.xlu0 %266
    %v268 = vsel %vm236, %v267, -inf
    %v269 = vrot.slane %v268, 4
    %v270 = vmax.f32 %v268, %v269
    %v271 = vrot.slane %v270, 2
    %v272 = vmax.f32 %v270, %v271
    %v273 = vrot.slane %v272, 1
    %v274 = vmax.f32 %v272, %v273
    %v275 = vsub.f32 %v264, %v274
    %v276 = vmul.f32 %v275, 1.442695
    %v277 = vpow.pop %v276
    %v278 = vsel %vm236, %v277, 0.0
    %279 = vadd.xlane.f32.xlu0 %v278
    %v280 = vpop.xlane.xlu0 %279
    %v281 = vsel %vm236, %v280, 0.0
    %v282 = vrot.slane %v281, 4
    %v283 = vadd.f32 %v281, %v282
    %v284 = vrot.slane %v283, 2
    %v285 = vadd.f32 %v283, %v284
    %v286 = vrot.slane %v285, 1
    %v287 = vadd.f32 %v285, %v286
    %v288 = vrcp.pop %v287
    %v289 = vmul.f32 1.0, %v288
    %v290 = vmul.f32 %v277, %v289
    %s291 = scalar_lea.vmem [#allocation7], 2
    %292 = vst [vmem:[%s291] sm:$0x3] %v290
    %v293 = vsel %vm234, %v227, -inf
    %v294 = vsel %vm236, %v293, -inf
    %295 = vmax.xlane.f32.xlu0 %v294
    %v296 = vpop.xlane.xlu0 %295
    %v297 = vsel %vm236, %v296, -inf
    %v298 = vrot.slane %v297, 4
    %v299 = vmax.f32 %v297, %v298
    %v300 = vrot.slane %v299, 2
    %v301 = vmax.f32 %v299, %v300
    %v302 = vrot.slane %v301, 1
    %v303 = vmax.f32 %v301, %v302
    %v304 = vsub.f32 %v293, %v303
    %v305 = vmul.f32 %v304, 1.442695
    %v306 = vpow.pop %v305
    %v307 = vsel %vm236, %v306, 0.0
    %308 = vadd.xlane.f32.xlu0 %v307
    %v309 = vpop.xlane.xlu0 %308
    %v310 = vsel %vm236, %v309, 0.0
    %v311 = vrot.slane %v310, 4
    %v312 = vadd.f32 %v310, %v311
    %v313 = vrot.slane %v312, 2
    %v314 = vadd.f32 %v312, %v313
    %v315 = vrot.slane %v314, 1
    %v316 = vadd.f32 %v314, %v315
    %v317 = vrcp.pop %v316
    %v318 = vmul.f32 1.0, %v317
    %v319 = vmul.f32 %v306, %v318
    %s320 = scalar_lea.vmem [#allocation7], 4
    %321 = vst [vmem:[%s320] sm:$0x3] %v319
    // Predicated region
    $region18: #{tpu_custom_call.1} parent=1 // pred_check
      _
    $region19: #{tpu_custom_call.1} parent=1 // pred_check_branch
      %323 = sbr.rel (0) target = $region21
    $region20: #{tpu_custom_call.1} parent=1 // pred_region
      %s325 = ssub.s32 96, 96
      %326 = vsyncadd [#allocation4], %s325
      %s327 = sshll.u32 [#allocation7], 4
      %s328 = int_to_ptr.vmem [resolvable:$true] %s327
      %333 = dma.vmem_to_hbm [thread:$0]  %s328, 96, %s2, [#allocation4], 32, 32, 2
    $region21: #{tpu_custom_call.1} parent=1 // pred_fallthru
      _
    // Predicated region
    $region22: #{tpu_custom_call.1} parent=1 // pred_check
      _
    $region23: #{tpu_custom_call.1} parent=1 // pred_check_branch
      %335 = sbr.rel (0) target = $region25
    $region24: #{tpu_custom_call.1} parent=1 // pred_region
      %336 = dma.done [#allocation4], 96
    $region25: #{tpu_custom_call.1} parent=1 // pred_fallthru
      _
    %337 = vsyncpa [#allocation3], 1
    %338 = vsyncpa [#allocation4], 1
    %339 = vsyncpa [#allocation5], 1

</llo_original>
